<compile_context>
chip_gen: v6e
topology: v6e:2x2x1
jax: 0.10.0
libtpu: 0.0.40
codegen_flags: <defaults>
</compile_context>

<pallas_src>
import jax
import jax.numpy as jnp
from jax import lax
from jax.experimental import pallas as pl
from jax.experimental.pallas import tpu as pltpu

# ----------------------------- config (small, synthetic) ---------------------
T, B = 2, 2            # time steps, batch
CIN, COUT = 4, 8       # conv channels
H, W = 16, 16          # spatial
K = 3                  # kernel size
PAD = 1                # padding=1 -> "same" output


# ----------------------------- Pallas kernel ---------------------------------
def _conv3x3_kernel(x_ref, wband_ref, brow_ref, o_ref):
    """NB images (row-flattened NHWC, bf16) -> NB output images (f32).

    x_ref    : (NB, H, W*Cin)      bf16 activations, lanes = W*Cin
    wband_ref: (3*W*Cin, W*Cout)   bf16 banded weight (kh + kw taps + W pad folded)
    brow_ref : (1, W*Cout)         f32 bias tiled along W
    o_ref    : (NB, H, W*Cout)     lane-dense f32 output (W*Cout = 128)
    """
    nb, h, wcin = x_ref.shape
    _, _, wcout = o_ref.shape

    x = x_ref[...]                                            # single VMEM load
    zrow = jnp.zeros((nb, 1, wcin), dtype=x.dtype)
    x_up = jnp.concatenate([zrow, x[:, :h - 1, :]], axis=1)   # input row r-1 (kh=0)
    x_dn = jnp.concatenate([x[:, 1:, :], zrow], axis=1)       # input row r+1 (kh=2)

    # One MXU matmul per block: (NB*H, 3*W*Cin) x (3*W*Cin, W*Cout), f32 acc.
    lhs = jnp.concatenate([x_up, x, x_dn], axis=-1).reshape(nb * h, 3 * wcin)
    acc = jnp.dot(lhs, wband_ref[...], preferred_element_type=jnp.float32)
    acc = acc + brow_ref[...]                                 # (1, W*Cout) f32
    o_ref[...] = acc.reshape(nb, h, wcout).astype(o_ref.dtype)


# ----------------------------- parameter prep (runs once) --------------------
def _build_banded_weight(weight_oihw, bias, w):
    """Fold kh, kw taps and the W zero-padding into one (3*W*Cin, W*Cout) band."""
    w_hwio = jnp.transpose(weight_oihw, (2, 3, 1, 0)).astype(jnp.float32)  # [K,K,Cin,Cout]
    cin, cout = w_hwio.shape[2], w_hwio.shape[3]
    bands = []
    for kh in range(K):
        band = jnp.zeros((w * cin, w * cout), jnp.float32)
        for kw in range(K):
            band = band + jnp.kron(
                jnp.eye(w, w, k=-(kw - PAD), dtype=jnp.float32), w_hwio[kh, kw])
        bands.append(band)
    wband = jnp.concatenate(bands, axis=0).astype(jnp.bfloat16)  # (3*W*Cin, W*Cout)
    brow = jnp.tile(bias.astype(jnp.float32), w).reshape(1, w * cout)
    return wband, brow


def make_td_layer(weight_oihw, bias, x_shape):
    """Returns a jitted forward for tdLayer(Conv2d(...), bn=None)."""
    t, b, cin, h, w = x_shape
    cout = weight_oihw.shape[0]
    n = t * b

    # Grid sizing: 2 "parallel" steps only on 2-TensorCore chips (v7x);
    # a single step (all images per block, bigger matmul M) on v5e / v6e.
    try:
        kind = jax.devices()[0].device_kind.lower()
    except Exception:
        kind = ""
    two_tc = ("v7" in kind) or ("7x" in kind)
    nb = n // 2 if (two_tc and n % 2 == 0) else n
    grid_steps = n // nb

    # Banded weight / bias row precomputed once (hoisted out of the hot path).
    wband, brow = _build_banded_weight(weight_oihw, bias, w)

    conv = pl.pallas_call(
        _conv3x3_kernel,
        out_shape=jax.ShapeDtypeStruct((n, h, w * cout), jnp.float32),
        grid=(grid_steps,),
        in_specs=[
            pl.BlockSpec((nb, h, w * cin), lambda i: (i, 0, 0)),
            pl.BlockSpec((K * w * cin, w * cout), lambda i: (0, 0)),
            pl.BlockSpec((1, w * cout), lambda i: (0, 0)),
        ],
        out_specs=pl.BlockSpec((nb, h, w * cout), lambda i: (i, 0, 0)),
        compiler_params=pltpu.CompilerParams(
            dimension_semantics=("parallel",)),
    )

    @jax.jit
    def forward(x_tbchw):
        # SeqToANNContainer: flatten (T, B) -> N images.
        x_flat = x_tbchw.reshape(n, cin, h, w)
        # NCHW -> NHWC row-flattened; bf16 halves DMA bytes (MXU-native dtype).
        x_rows = jnp.transpose(x_flat, (0, 2, 3, 1)).reshape(n, h, w * cin)
        y_rows = conv(x_rows.astype(jnp.bfloat16), wband, brow)
        # Lanes -> (W, Cout), NHWC -> NCHW (external contract), un-flatten (T, B).
        y_nchw = jnp.transpose(y_rows.reshape(n, h, w, cout), (0, 3, 1, 2))
        return y_nchw.reshape(t, b, cout, h, w)
        # TODO(synk): tdLayer(bn=...) branch not implemented since bn=None here.

    return forward


# ----------------------------- reference + driver ----------------------------
def _reference(x_tbchw, weight_oihw, bias):
    t, b, cin, h, w = x_tbchw.shape
    x_flat = x_tbchw.reshape(t * b, cin, h, w)
    y = lax.conv_general_dilated(
        x_flat, weight_oihw, window_strides=(1, 1),
        padding=((PAD, PAD), (PAD, PAD)),
        dimension_numbers=("NCHW", "OIHW", "NCHW"))
    y = y + bias.reshape(1, -1, 1, 1)
    return y.reshape(t, b, weight_oihw.shape[0], h, w)


if __name__ == "__main__":
    key = jax.random.PRNGKey(0)
    kx, kw_, kb = jax.random.split(key, 3)

    x = jax.random.normal(kx, (T, B, CIN, H, W), dtype=jnp.float32)
    # Deterministic Conv2d-shaped parameters (OIHW), Kaiming-ish scale.
    fan_in = CIN * K * K
    weight = jax.random.normal(kw_, (COUT, CIN, K, K), dtype=jnp.float32) / jnp.sqrt(fan_in)
    bias = jax.random.normal(kb, (COUT,), dtype=jnp.float32) * 0.01

    td_forward = make_td_layer(weight, bias, x.shape)
    y = td_forward(x)
    jax.block_until_ready(y)

    y_ref = _reference(x, weight, bias)
    assert y.shape == (T, B, COUT, H, W), y.shape
    # bf16 activations/weights (f32 accumulation) -> loosened tolerance.
    assert jnp.allclose(y, y_ref, atol=5e-2, rtol=5e-2), "mismatch vs reference"

    print("KERNEL_OK")
</pallas_src>

<mosaic_0001>
module attributes {stable_mosaic.version = 11 : i64} {
  func.func @_conv3x3_kernel(%arg0: i32, %arg1: memref<4x16x64xbf16, #tpu.memory_space<vmem>>, %arg2: memref<192x128xbf16, #tpu.memory_space<vmem>>, %arg3: memref<1x128xf32, #tpu.memory_space<vmem>>, %arg4: memref<4x16x128xf32, #tpu.memory_space<vmem>>) attributes {dimension_semantics = [#tpu.dimension_semantics<parallel>], iteration_bounds = array<i64: 1>, scalar_prefetch = 0 : i64, scratch_operands = 0 : i64, tpu.core_type = #tpu.core_type<tc>, window_params = [{transform_indices = @transform_0, window_bounds = array<i64: 4, 16, 64>}, {pipeline_mode = #tpu.pipeline_mode<synchronous>, transform_indices = @transform_1, window_bounds = array<i64: 192, 128>}, {pipeline_mode = #tpu.pipeline_mode<synchronous>, transform_indices = @transform_2, window_bounds = array<i64: 1, 128>}, {transform_indices = @transform_3, window_bounds = array<i64: 4, 16, 128>}]} {
    %c0 = arith.constant 0 : index
    %c0_0 = arith.constant 0 : index
    %c0_1 = arith.constant 0 : index
    %0 = vector.load %arg1[%c0, %c0_0, %c0_1] : memref<4x16x64xbf16, #tpu.memory_space<vmem>>, vector<4x16x64xbf16>
    %cst = arith.constant 0.000000e+00 : bf16
    %1 = vector.broadcast %cst : bf16 to vector<4x1x64xbf16>
    %2 = vector.extract_strided_slice %0 {offsets = [0, 0, 0], sizes = [4, 15, 64], strides = [1, 1, 1]} : vector<4x16x64xbf16> to vector<4x15x64xbf16>
    %3 = tpu.concatenate %1, %2 in 1 : vector<4x1x64xbf16>, vector<4x15x64xbf16> -> vector<4x16x64xbf16>
    %4 = vector.extract_strided_slice %0 {offsets = [0, 1, 0], sizes = [4, 15, 64], strides = [1, 1, 1]} : vector<4x16x64xbf16> to vector<4x15x64xbf16>
    %5 = tpu.concatenate %4, %1 in 1 : vector<4x15x64xbf16>, vector<4x1x64xbf16> -> vector<4x16x64xbf16>
    %6 = tpu.concatenate %3, %0, %5 in 2 : vector<4x16x64xbf16>, vector<4x16x64xbf16>, vector<4x16x64xbf16> -> vector<4x16x192xbf16>
    %7 = vector.shape_cast %6 : vector<4x16x192xbf16> to vector<64x192xbf16>
    %c0_2 = arith.constant 0 : index
    %c0_3 = arith.constant 0 : index
    %8 = vector.load %arg2[%c0_2, %c0_3] : memref<192x128xbf16, #tpu.memory_space<vmem>>, vector<192x128xbf16>
    %cst_4 = arith.constant dense<0.000000e+00> : vector<64x128xf32>
    %9 = tpu.matmul %7, %8, %cst_4 {dimension_numbers = #tpu.dot_dimension_numbers<[1], [0], [0], [1], [0, 0, 1, 1], [], []>} : vector<64x192xbf16>, vector<192x128xbf16>, vector<64x128xf32> -> vector<64x128xf32>
    %c0_5 = arith.constant 0 : index
    %c0_6 = arith.constant 0 : index
    %10 = vector.load %arg3[%c0_5, %c0_6] : memref<1x128xf32, #tpu.memory_space<vmem>>, vector<1x128xf32>
    %11 = vector.broadcast %10 : vector<1x128xf32> to vector<64x128xf32>
    %12 = arith.addf %9, %11 : vector<64x128xf32>
    %13 = vector.shape_cast %12 : vector<64x128xf32> to vector<4x16x128xf32>
    %c0_7 = arith.constant 0 : index
    %c0_8 = arith.constant 0 : index
    %c0_9 = arith.constant 0 : index
    %14 = vector.load %arg4[%c0_7, %c0_8, %c0_9] : memref<4x16x128xf32, #tpu.memory_space<vmem>>, vector<4x16x128xf32>
    tpu.vector_store %arg4[%c0_7, %c0_8, %c0_9], %13 {strides = array<i32>} : memref<4x16x128xf32, #tpu.memory_space<vmem>>, vector<4x16x128xf32>,
    return
  }
  func.func @transform_0(%arg0: i32) -> (i32, i32, i32) {
    %c0_i32 = arith.constant 0 : i32
    %c0_i32_0 = arith.constant 0 : i32
    %c0_i32_1 = arith.constant 0 : i32
    return %arg0, %c0_i32, %c0_i32_0 : i32, i32, i32
  }
  func.func @transform_1(%arg0: i32) -> (i32, i32) {
    %c0_i32 = arith.constant 0 : i32
    %c0_i32_0 = arith.constant 0 : i32
    %c0_i32_1 = arith.constant 0 : i32
    return %c0_i32, %c0_i32_0 : i32, i32
  }
  func.func @transform_2(%arg0: i32) -> (i32, i32) {
    %c0_i32 = arith.constant 0 : i32
    %c0_i32_0 = arith.constant 0 : i32
    %c0_i32_1 = arith.constant 0 : i32
    return %c0_i32, %c0_i32_0 : i32, i32
  }
  func.func @transform_3(%arg0: i32) -> (i32, i32, i32) {
    %c0_i32 = arith.constant 0 : i32
    %c0_i32_0 = arith.constant 0 : i32
    %c0_i32_1 = arith.constant 0 : i32
    return %arg0, %c0_i32, %c0_i32_0 : i32, i32, i32
  }
}

</mosaic_0001>

<llo_original>
// kernel: forward.1
$region0: #{forward.1}
  #allocation0 [shape = 'u32[]', space=smem, size = 0x4, offset = 0x4, fixed_abs, tag = 'smem constant byte address 0x4 - core index']
  #allocation1 [shape = 'u32[144,128]{1,0:T(1,128)}', space=vmem, size = 0x12000, scoped, tag = 'internal scratch']
  %s0 = inlined_call_operand.vmem [shape: bf16[4,16,64], index: 0, kind: input, shape index: {}]
  %s1 = inlined_call_operand.vmem [shape: bf16[192,128], index: 1, kind: input, shape index: {}]
  %s2 = inlined_call_operand.vmem [shape: f32[1,128], index: 2, kind: input, shape index: {}]
  %s3 = inlined_call_operand.vmem [shape: f32[4,16,128], index: 3, kind: output, shape index: {}]
  %s4 = sld [smem:[#allocation0]]
  $region22: #{forward.1} parent=0
    _
  %s6 = ssub.s32 1, %s4
  %s7 = scalar_select 0, %s6, %s4
  // Predicated region
  $region2: #{forward.1} parent=0 // pred_check
    _
  $region3: #{forward.1} parent=0 // pred_check_branch
    %9 = sbr.rel (0) target = $region5
  $region4: #{forward.1} parent=0 // pred_region
    _
  $region5: #{forward.1} parent=0 // pred_fallthru
    _
  // Predicated region
  $region6: #{forward.1} parent=0 // pred_check
    _
  $region7: #{forward.1} parent=0 // pred_check_branch
    %11 = sbr.rel (0) target = $region9
  $region8: #{forward.1} parent=0 // pred_region
    _
  $region9: #{forward.1} parent=0 // pred_fallthru
    _
  // Predicated region
  $region10: #{forward.1} parent=0 // pred_check
    _
  $region11: #{forward.1} parent=0 // pred_check_branch
    %13 = sbr.rel (0) target = $region13
  $region12: #{forward.1} parent=0 // pred_region
    _
  $region13: #{forward.1} parent=0 // pred_fallthru
    _
  %v15 = vld [vmem:[%s0] sm:$0xf]
  %v16 = vld [vmem:[%s0 + $0x4] sm:$0xf]
  %v17 = vld [vmem:[%s0 + $0x8] sm:$0xf]
  %v18 = vld [vmem:[%s0 + $0xc] sm:$0xf]
  %v19 = vld [vmem:[%s0 + $0x10] sm:$0xf]
  %v20 = vld [vmem:[%s0 + $0x14] sm:$0xf]
  %v21 = vld [vmem:[%s0 + $0x18] sm:$0xf]
  %v22 = vld [vmem:[%s0 + $0x1c] sm:$0xf]
  %v31 = vunpack.c.l.b16 %v15
  %v32 = vunpack.c.l.b16 %v16
  %v33 = vunpack.c.l.b16 %v17
  %v34 = vunpack.c.l.b16 %v18
  %v35 = vunpack.c.l.b16 %v19
  %v36 = vunpack.c.l.b16 %v20
  %v37 = vunpack.c.l.b16 %v21
  %v38 = vunpack.c.l.b16 %v22
  %v39 = vpack.c.b16 %v32, %v31
  %v40 = vpack.c.b16 %v34, %v33
  %v41 = vpack.c.b16 %v36, %v35
  %v42 = vpack.c.b16 %v38, %v37
  %v44 = vshrl.u32 %v39, 16
  %v46 = vrot.slane %v44, 7
  %v47 = vshll.u32 %v39, 16
  %v49 = vor.u32 %v46, %v47
  %v51 = vshrl.u32 %v40, 16
  %v53 = vrot.slane %v51, 7
  %v54 = vshll.u32 %v40, 16
  %v56 = vor.u32 %v53, %v54
  %v58 = vshrl.u32 %v41, 16
  %v60 = vrot.slane %v58, 7
  %v61 = vshll.u32 %v41, 16
  %v63 = vor.u32 %v60, %v61
  %v65 = vshrl.u32 %v42, 16
  %v67 = vrot.slane %v65, 7
  %v68 = vshll.u32 %v42, 16
  %v70 = vor.u32 %v67, %v68
  %vm75 = vcmask 1040384
  %vm76 = vsmask.f32 256
  %vm77 = vmand %vm75, %vm76
  %v78 = vsel %vm77, 0, %v49
  %v79 = vsel %vm77, 0, %v56
  %v80 = vsel %vm77, 0, %v63
  %v81 = vsel %vm77, 0, %v70
  %v82 = vrot.slane %v47, 1
  %v83 = vor.u32 %v44, %v82
  %v84 = vrot.slane %v54, 1
  %v85 = vor.u32 %v51, %v84
  %v86 = vrot.slane %v61, 1
  %v87 = vor.u32 %v58, %v86
  %v88 = vrot.slane %v68, 1
  %v89 = vor.u32 %v65, %v88
  %vm94 = vcmask 1047552
  %vm95 = vsmask.f32 7424
  %vm96 = vmand %vm94, %vm95
  %v97 = vsel %vm96, %v83, 0
  %v98 = vsel %vm96, %v85, 0
  %v99 = vsel %vm96, %v87, 0
  %v100 = vsel %vm96, %v89, 0
  %101 = vrot.lane.b32.xlu0 %v39, 64
  %v102 = vpop.permute.xlu0 %101
  %103 = vrot.lane.b32.xlu0 %v40, 64
  %v104 = vpop.permute.xlu0 %103
  %105 = vrot.lane.b32.xlu0 %v41, 64
  %v106 = vpop.permute.xlu0 %105
  %107 = vrot.lane.b32.xlu0 %v42, 64
  %v108 = vpop.permute.xlu0 %107
  %vm109 = vcmask 523264
  %v112 = vsel %vm109, %v78, %v102
  %v116 = vsel %vm109, %v79, %v104
  %v120 = vsel %vm109, %v80, %v106
  %v124 = vsel %vm109, %v81, %v108
  %v126 = vld [vmem:[%s1] sm:$0xf]
  %v127 = vld [vmem:[%s1 + $0x4] sm:$0xf]
  %v128 = vld [vmem:[%s1 + $0x8] sm:$0xf]
  %v129 = vld [vmem:[%s1 + $0xc] sm:$0xf]
  %v130 = vld [vmem:[%s1 + $0x10] sm:$0xf]
  %v131 = vld [vmem:[%s1 + $0x14] sm:$0xf]
  %v132 = vld [vmem:[%s1 + $0x18] sm:$0xf]
  %v133 = vld [vmem:[%s1 + $0x1c] sm:$0xf]
  %v134 = vld [vmem:[%s1 + $0x20] sm:$0xf]
  %v135 = vld [vmem:[%s1 + $0x24] sm:$0xf]
  %v136 = vld [vmem:[%s1 + $0x28] sm:$0xf]
  %v137 = vld [vmem:[%s1 + $0x2c] sm:$0xf]
  %v138 = vld [vmem:[%s1 + $0x30] sm:$0xf]
  %v139 = vld [vmem:[%s1 + $0x34] sm:$0xf]
  %v140 = vld [vmem:[%s1 + $0x38] sm:$0xf]
  %v141 = vld [vmem:[%s1 + $0x3c] sm:$0xf]
  %v142 = vld [vmem:[%s1 + $0x40] sm:$0xf]
  %v143 = vld [vmem:[%s1 + $0x44] sm:$0xf]
  %v144 = vld [vmem:[%s1 + $0x48] sm:$0xf]
  %v145 = vld [vmem:[%s1 + $0x4c] sm:$0xf]
  %v146 = vld [vmem:[%s1 + $0x50] sm:$0xf]
  %v147 = vld [vmem:[%s1 + $0x54] sm:$0xf]
  %v148 = vld [vmem:[%s1 + $0x58] sm:$0xf]
  %v149 = vld [vmem:[%s1 + $0x5c] sm:$0xf]
  %v150 = vld [vmem:[%s2] sm:$0x1]
  %v152 = vlaneseq
  %v153 = vshrl.u32 %v152, 7
  %v154 = vsub.s32 0, %v153
  %v155 = vrot.slane %v150, %v154
  %v181 = vunpack.c.l.b16 %v126
  %v182 = vunpack.c.l.b16 %v127
  %v183 = vunpack.c.l.b16 %v128
  %v184 = vunpack.c.l.b16 %v129
  %v185 = vunpack.c.l.b16 %v130
  %v186 = vunpack.c.l.b16 %v131
  %v187 = vunpack.c.l.b16 %v132
  %v188 = vunpack.c.l.b16 %v133
  %v189 = vunpack.c.l.b16 %v134
  %v190 = vunpack.c.l.b16 %v135
  %v191 = vunpack.c.l.b16 %v136
  %v192 = vunpack.c.l.b16 %v137
  %v193 = vunpack.c.l.b16 %v138
  %v194 = vunpack.c.l.b16 %v139
  %v195 = vunpack.c.l.b16 %v140
  %v196 = vunpack.c.l.b16 %v141
  %v197 = vunpack.c.l.b16 %v142
  %v198 = vunpack.c.l.b16 %v143
  %v199 = vunpack.c.l.b16 %v144
  %v200 = vunpack.c.l.b16 %v145
  %v201 = vunpack.c.l.b16 %v146
  %v202 = vunpack.c.l.b16 %v147
  %v203 = vunpack.c.l.b16 %v148
  %v204 = vunpack.c.l.b16 %v149
  %v205 = vpack.c.b16 %v182, %v181
  %v206 = vpack.c.b16 %v184, %v183
  %v207 = vpack.c.b16 %v186, %v185
  %v208 = vpack.c.b16 %v188, %v187
  %v209 = vpack.c.b16 %v190, %v189
  %v210 = vpack.c.b16 %v192, %v191
  %v211 = vpack.c.b16 %v194, %v193
  %v212 = vpack.c.b16 %v196, %v195
  %v213 = vpack.c.b16 %v198, %v197
  %v214 = vpack.c.b16 %v200, %v199
  %v215 = vpack.c.b16 %v202, %v201
  %v216 = vpack.c.b16 %v204, %v203
  %v230 = vsel %vm109, %v97, 0
  %v233 = vsel %vm109, %v98, 0
  %v236 = vsel %vm109, %v99, 0
  %v239 = vsel %vm109, %v100, 0
  %241 = vmatprep.subr.bf16.mxu0 0
  %242 = vmatpush1.bf16.msra.mxu0 %v212
  %243 = vmatprep.subr.bf16.mxu0 0
  %244 = vmatpush1.bf16.msra.mxu0 %v211
  %245 = vmatprep.subr.bf16.mxu0 0
  %246 = vmatpush1.bf16.msra.mxu0 %v210
  %247 = vmatprep.subr.bf16.mxu0 0
  %248 = vmatpush1.bf16.msra.mxu0 %v209
  %249 = vmatprep.subr.bf16.mxu0 0
  %250 = vmatpush1.bf16.msra.mxu0 %v208
  %251 = vmatprep.subr.bf16.mxu0 0
  %252 = vmatpush1.bf16.msra.mxu0 %v207
  %253 = vmatprep.subr.bf16.mxu0 0
  %254 = vmatpush1.bf16.msra.mxu0 %v206
  %255 = vmatprep.subr.bf16.mxu0 0
  %256 = vmatpush1.bf16.msra.mxu0 %v205
  %257 = vmatprep.subr.bf16.mxu0 0
  %258 = vmatpush2.bf16.msra.mxu0 0
  %259 = vmatprep.subr.bf16.mxu0 0
  %260 = vmatpush2.bf16.msra.mxu0 0
  %261 = vmatprep.subr.bf16.mxu0 0
  %262 = vmatpush2.bf16.msra.mxu0 0
  %263 = vmatprep.subr.bf16.mxu0 0
  %264 = vmatpush2.bf16.msra.mxu0 0
  %265 = vmatprep.subr.bf16.mxu0 0
  %266 = vmatpush2.bf16.msra.mxu0 %v216
  %267 = vmatprep.subr.bf16.mxu0 0
  %268 = vmatpush2.bf16.msra.mxu0 %v215
  %269 = vmatprep.subr.bf16.mxu0 0
  %270 = vmatpush2.bf16.msra.mxu0 %v214
  %271 = vmatprep.subr.bf16.mxu0 0
  %272 = vmatpush2.bf16.msra.mxu0 %v213
  %273 = vmatprep.mubr.bf16.mxu0 %v230
  %274 = vmatmul.mubr.bf16.gmra.mxu0 %v112
  %v275 = vpop.f32.mrf.mxu0
  %v276 = vadd.f32 %v155, %v275
  %v277 = vpop.f32.mrf.mxu0
  %v278 = vpop.f32.mrf.mxu0
  %v279 = vadd.f32 %v155, %v278
  %v280 = vpop.f32.mrf.mxu0
  %281 = vmatprep.mubr.bf16.mxu0 %v233
  %282 = vmatmul.mubr.bf16.gmra.mxu0 %v116
  %v283 = vpop.f32.mrf.mxu0
  %v284 = vadd.f32 %v155, %v283
  %v285 = vpop.f32.mrf.mxu0
  %v286 = vpop.f32.mrf.mxu0
  %v287 = vadd.f32 %v155, %v286
  %v288 = vpop.f32.mrf.mxu0
  %289 = vmatprep.mubr.bf16.mxu0 %v236
  %290 = vmatmul.mubr.bf16.gmra.mxu0 %v120
  %v291 = vpop.f32.mrf.mxu0
  %v292 = vadd.f32 %v155, %v291
  %v293 = vpop.f32.mrf.mxu0
  %v294 = vpop.f32.mrf.mxu0
  %v295 = vadd.f32 %v155, %v294
  %v296 = vpop.f32.mrf.mxu0
  %297 = vmatprep.mubr.bf16.mxu0 %v239
  %298 = vmatmul.mubr.bf16.gmra.mxu0 %v124
  %v299 = vpop.f32.mrf.mxu0
  %v300 = vadd.f32 %v155, %v299
  %v301 = vpop.f32.mrf.mxu0
  %v302 = vpop.f32.mrf.mxu0
  %v303 = vadd.f32 %v155, %v302
  %v304 = vpop.f32.mrf.mxu0
  %305 = vdwg.mxu0
  %306 = vst [vmem:[%s3] sm:$0xff] %v276
  %307 = vst [vmem:[%s3 + $0x8] sm:$0xff] %v279
  %308 = vst [vmem:[%s3 + $0x10] sm:$0xff] %v284
  %309 = vst [vmem:[%s3 + $0x18] sm:$0xff] %v287
  %310 = vst [vmem:[%s3 + $0x20] sm:$0xff] %v292
  %311 = vst [vmem:[%s3 + $0x28] sm:$0xff] %v295
  %312 = vst [vmem:[%s3 + $0x30] sm:$0xff] %v300
  %313 = vst [vmem:[%s3 + $0x38] sm:$0xff] %v303
  // Predicated region
  $region14: #{forward.1} parent=0 // pred_check
    _
  $region15: #{forward.1} parent=0 // pred_check_branch
    %315 = sbr.rel (0) target = $region17
  $region16: #{forward.1} parent=0 // pred_region
    _
  $region17: #{forward.1} parent=0 // pred_fallthru
    _
  // Predicated region
  $region18: #{forward.1} parent=0 // pred_check
    _
  $region19: #{forward.1} parent=0 // pred_check_branch
    %317 = sbr.rel (0) target = $region21
  $region20: #{forward.1} parent=0 // pred_region
    _
  $region21: #{forward.1} parent=0 // pred_fallthru
    _

</llo_original>
